<compile_context>
chip_gen: v7x
topology: tpu7x:2x2x1
jax: 0.10.0
libtpu: 0.0.40
codegen_flags: <defaults>
</compile_context>

<pallas_src>
import math
import functools

import numpy as np
import jax
import jax.numpy as jnp
from jax.experimental import pallas as pl
from jax.experimental.pallas import tpu as pltpu


def _round_up(x: int, m: int) -> int:
    return ((x + m - 1) // m) * m


def _tile_sizes(M, N, K, tm, tn, tk):
    """Clamp requested tiles for small problems while keeping (8, 128) tiling."""
    tm_e = min(tm, _round_up(M, 8))
    tn_e = min(tn, _round_up(N, 128))
    tk_e = min(tk, _round_up(K, 128))
    return tm_e, tn_e, tk_e


def _cp_nn_kernel(x_ref, w_ref, b_ref, o_ref, *, approx_sigmoid: bool):
    """One (tm, tn) output tile; accumulates over the K grid axis directly in o_ref.

    x_ref: (tm, tk) activations (f32 or bf16)
    w_ref: (tk, tn) masked + pre-transposed weight (same dtype as x)
    b_ref: (1, tn)  f32 bias
    o_ref: (tm, tn) f32 output tile -- its block index ignores k, so it is
           resident across the K axis and doubles as the accumulator.
    """
    k = pl.program_id(2)

    @pl.when(k == 0)
    def _():
        o_ref[...] = jnp.zeros_like(o_ref)

    o_ref[...] += jnp.dot(
        x_ref[...], w_ref[...], preferred_element_type=jnp.float32
    )

    @pl.when(k == pl.num_programs(2) - 1)
    def _():
        y = o_ref[...] + b_ref[...]
        # QuickGELU: y * sigmoid(1.702 * y); exp + reciprocal stay on the EUP slot.
        s = pl.reciprocal(1.0 + jnp.exp(-1.702 * y), approx=approx_sigmoid)
        o_ref[...] = y * s


def prepare_sparse_linear(weight, cp_mask, bias, *, tn=512, tk=512,
                          compute_dtype=jnp.float32):
    """One-time (per layer) weight prep, hoisted out of the per-call forward.

    Fuses the sparsity mask into the weight, transposes to (K, N) so the kernel
    RHS is lane-major, zero-pads K/N up to whole tiles, and casts to the compute
    dtype.  Returns (w_prepped, b_prepped)."""
    N, K = weight.shape
    assert cp_mask.shape == weight.shape and bias.shape == (N,)
    _, tn_e, tk_e = _tile_sizes(8, N, K, 8, tn, tk)
    Np, Kp = _round_up(N, tn_e), _round_up(K, tk_e)

    w_masked_t = (weight.astype(jnp.float32) * cp_mask.astype(jnp.float32)).T
    w_p = jnp.pad(w_masked_t, ((0, Kp - K), (0, Np - N))).astype(compute_dtype)
    b_p = jnp.pad(bias.astype(jnp.float32).reshape(1, N), ((0, 0), (0, Np - N)))
    return w_p, b_p


@functools.partial(
    jax.jit,
    static_argnames=("n_valid", "tm", "tn", "tk", "compute_dtype", "approx_sigmoid"),
)
def random_sparse_nn_forward_prepped(x, w_p, b_p, *, n_valid, tm=256, tn=512,
                                     tk=512, compute_dtype=jnp.float32,
                                     approx_sigmoid=False):
    """x: (M, K); w_p: (Kp, Np) prepped masked W^T; b_p: (1, Np) f32 bias."""
    M, K = x.shape
    Kp, Np = w_p.shape
    N = n_valid

    tm_e, tn_e, tk_e = _tile_sizes(M, N, K, tm, tn, tk)
    assert Kp % tk_e == 0 and Np % tn_e == 0, (
        "prepare_sparse_linear must be called with the same tn/tk as the forward")

    Mp = _round_up(M, tm_e)

    # v7x megacore guard: keep the M x N block count >= 2 when the problem allows
    # it (both TensorCores busy); v5e/v6e single-TC -> neutral.
    while ((Mp // tm_e) * (Np // tn_e) < 2 and tn_e >= 256
           and (tn_e // 2) % 128 == 0 and Np // (tn_e // 2) >= 2):
        tn_e //= 2

    x_c = x.astype(jnp.float32).astype(compute_dtype)
    x_p = jnp.pad(x_c, ((0, Mp - M), (0, Kp - K)))

    grid = (Mp // tm_e, Np // tn_e, Kp // tk_e)

    in_itemsize = np.dtype(compute_dtype).itemsize
    # Double-buffered VMEM working set (+50% margin), capped below v7x's 64 MiB.
    vmem_bytes = int(1.5 * (2 * (tm_e * tk_e + tk_e * tn_e) * in_itemsize
                            + 2 * tn_e * 4 + 2 * tm_e * tn_e * 4))
    vmem_limit = min(max(vmem_bytes, 32 * 1024 * 1024), 48 * 1024 * 1024)

    cost = pl.CostEstimate(
        flops=2 * Mp * Np * Kp,
        transcendentals=Mp * Np,
        bytes_accessed=(Mp * Kp + Kp * Np) * in_itemsize + (Np + Mp * Np) * 4,
    )

    out = pl.pallas_call(
        functools.partial(_cp_nn_kernel, approx_sigmoid=approx_sigmoid),
        out_shape=jax.ShapeDtypeStruct((Mp, Np), jnp.float32),
        grid=grid,
        in_specs=[
            pl.BlockSpec((tm_e, tk_e), lambda i, j, k: (i, k)),   # x
            pl.BlockSpec((tk_e, tn_e), lambda i, j, k: (k, j)),   # masked W^T
            pl.BlockSpec((1, tn_e), lambda i, j, k: (0, j)),      # bias
        ],
        out_specs=pl.BlockSpec((tm_e, tn_e), lambda i, j, k: (i, j)),
        compiler_params=pltpu.CompilerParams(
            # M/N parallel (megacore sharding on v7x), K is the reduction axis.
            dimension_semantics=("parallel", "parallel", "arbitrary"),
            vmem_limit_bytes=vmem_limit,
        ),
        cost_estimate=cost,
    )(x_p, w_p, b_p)

    return out[:M, :N]


def random_sparse_nn_forward(x, weight, cp_mask, bias, *, tm=256, tn=512, tk=512,
                             compute_dtype=jnp.float32, approx_sigmoid=False):
    """Convenience path that preps the weight on every call.  For repeated calls,
    call prepare_sparse_linear() once at init and use the *_prepped forward."""
    w_p, b_p = prepare_sparse_linear(weight, cp_mask, bias, tn=tn, tk=tk,
                                     compute_dtype=compute_dtype)
    return random_sparse_nn_forward_prepped(
        x, w_p, b_p, n_valid=weight.shape[0], tm=tm, tn=tn, tk=tk,
        compute_dtype=compute_dtype, approx_sigmoid=approx_sigmoid)


def init_random_sparse_linear_params(key, in_features, out_features):
    """Matches PyTorch kaiming_uniform_(a=sqrt(5)) + bias uniform(+-1/sqrt(fan_in))."""
    kw, kb = jax.random.split(key)
    bound = 1.0 / math.sqrt(in_features)
    weight = jax.random.uniform(
        kw, (out_features, in_features), jnp.float32, -bound, bound
    )
    bias = jax.random.uniform(kb, (out_features,), jnp.float32, -bound, bound)
    return weight, bias


def generate_random_sparse_mask(key, in_features, out_features, sparsity=0.5):
    """Binary mask with exactly (1 - sparsity) fraction of ones (like the PyTorch fn).

    Returned in the (out_features, in_features) layout of the weight.  (The original
    module builds the mask as (in, out) and elementwise-multiplies it with the
    (out, in) weight, which only broadcasts when in == out; the demo uses square dims.)
    """
    total = in_features * out_features
    num_nonzero = int((1.0 - sparsity) * total)
    perm = jax.random.permutation(key, total)
    flat = jnp.zeros((total,), jnp.float32).at[perm[:num_nonzero]].set(1.0)
    return flat.reshape(out_features, in_features)


if __name__ == "__main__":
    # Small deterministic example (square dims, as the original module implies).
    batch, in_dim, out_dim = 8, 32, 32

    key = jax.random.PRNGKey(0)
    k_x, k_p, k_m = jax.random.split(key, 3)

    x = jax.random.normal(k_x, (batch, in_dim), jnp.float32)
    weight, bias = init_random_sparse_linear_params(k_p, in_dim, out_dim)
    cp_mask = generate_random_sparse_mask(k_m, in_dim, out_dim, sparsity=0.5)

    # One-time weight prep (hoisted out of the per-call forward), then run.
    w_p, b_p = prepare_sparse_linear(weight, cp_mask, bias)
    out = random_sparse_nn_forward_prepped(x, w_p, b_p, n_valid=out_dim)
    out = jax.block_until_ready(out)

    # Pure-JAX reference check (strict f32 path, exact sigmoid).
    y_ref = x @ (weight * cp_mask).T + bias
    ref = y_ref * jax.nn.sigmoid(1.702 * y_ref)
    assert out.shape == (batch, out_dim)
    assert jnp.allclose(out, ref, atol=1e-5, rtol=1e-5)

    print("KERNEL_OK")
</pallas_src>

<mosaic_0001>
module attributes {stable_mosaic.version = 11 : i64} {
  func.func @_cp_nn_kernel(%arg0: i32, %arg1: i32, %arg2: i32, %arg3: memref<8x128xf32, #tpu.memory_space<vmem>>, %arg4: memref<128x128xf32, #tpu.memory_space<vmem>>, %arg5: memref<1x128xf32, #tpu.memory_space<vmem>>, %arg6: memref<8x128xf32, #tpu.memory_space<vmem>>) attributes {dimension_semantics = [#tpu.dimension_semantics<parallel>, #tpu.dimension_semantics<parallel>, #tpu.dimension_semantics<arbitrary>], iteration_bounds = array<i64: 1, 1, 1>, scalar_prefetch = 0 : i64, scratch_operands = 0 : i64, tpu.core_type = #tpu.core_type<tc>, window_params = [{transform_indices = @transform_0, window_bounds = array<i64: 8, 128>}, {transform_indices = @transform_1, window_bounds = array<i64: 128, 128>}, {transform_indices = @transform_2, window_bounds = array<i64: 1, 128>}, {transform_indices = @transform_3, window_bounds = array<i64: 8, 128>}]} {
    %c0_i32 = arith.constant 0 : i32
    %0 = arith.cmpi eq, %arg2, %c0_i32 : i32
    %1 = arith.extui %0 : i1 to i32
    %c0_i32_0 = arith.constant 0 : i32
    %2 = arith.cmpi ne, %1, %c0_i32_0 : i32
    scf.if %2 {
      %cst_10 = arith.constant 0.000000e+00 : f32
      %12 = vector.broadcast %cst_10 : f32 to vector<8x128xf32>
      %c0_11 = arith.constant 0 : index
      %c0_12 = arith.constant 0 : index
      %13 = vector.load %arg6[%c0_11, %c0_12] : memref<8x128xf32, #tpu.memory_space<vmem>>, vector<8x128xf32>
      tpu.vector_store %arg6[%c0_11, %c0_12], %12 {strides = array<i32>} : memref<8x128xf32, #tpu.memory_space<vmem>>, vector<8x128xf32>,
    } else {
    }
    %c0 = arith.constant 0 : index
    %c0_1 = arith.constant 0 : index
    %3 = vector.load %arg6[%c0, %c0_1] : memref<8x128xf32, #tpu.memory_space<vmem>>, vector<8x128xf32>
    %c0_2 = arith.constant 0 : index
    %c0_3 = arith.constant 0 : index
    %4 = vector.load %arg3[%c0_2, %c0_3] : memref<8x128xf32, #tpu.memory_space<vmem>>, vector<8x128xf32>
    %c0_4 = arith.constant 0 : index
    %c0_5 = arith.constant 0 : index
    %5 = vector.load %arg4[%c0_4, %c0_5] : memref<128x128xf32, #tpu.memory_space<vmem>>, vector<128x128xf32>
    %cst = arith.constant dense<0.000000e+00> : vector<8x128xf32>
    %6 = tpu.matmul %4, %5, %cst {dimension_numbers = #tpu.dot_dimension_numbers<[1], [0], [0], [1], [0, 0, 1, 1], [], []>} : vector<8x128xf32>, vector<128x128xf32>, vector<8x128xf32> -> vector<8x128xf32>
    %7 = arith.addf %3, %6 : vector<8x128xf32>
    %c0_6 = arith.constant 0 : index
    %c0_7 = arith.constant 0 : index
    %8 = vector.load %arg6[%c0_6, %c0_7] : memref<8x128xf32, #tpu.memory_space<vmem>>, vector<8x128xf32>
    tpu.vector_store %arg6[%c0_6, %c0_7], %7 {strides = array<i32>} : memref<8x128xf32, #tpu.memory_space<vmem>>, vector<8x128xf32>,
    %c0_i32_8 = arith.constant 0 : i32
    %9 = arith.cmpi eq, %arg2, %c0_i32_8 : i32
    %10 = arith.extui %9 : i1 to i32
    %c0_i32_9 = arith.constant 0 : i32
    %11 = arith.cmpi ne, %10, %c0_i32_9 : i32
    scf.if %11 {
      %c0_10 = arith.constant 0 : index
      %c0_11 = arith.constant 0 : index
      %12 = vector.load %arg6[%c0_10, %c0_11] : memref<8x128xf32, #tpu.memory_space<vmem>>, vector<8x128xf32>
      %c0_12 = arith.constant 0 : index
      %c0_13 = arith.constant 0 : index
      %13 = vector.load %arg5[%c0_12, %c0_13] : memref<1x128xf32, #tpu.memory_space<vmem>>, vector<1x128xf32>
      %14 = vector.broadcast %13 : vector<1x128xf32> to vector<8x128xf32>
      %15 = arith.addf %12, %14 : vector<8x128xf32>
      %cst_14 = arith.constant -1.702000e+00 : f32
      %16 = vector.broadcast %cst_14 : f32 to vector<8x128xf32>
      %17 = arith.mulf %16, %15 : vector<8x128xf32>
      %18 = math.exp %17 : vector<8x128xf32>
      %cst_15 = arith.constant 1.000000e+00 : f32
      %19 = vector.broadcast %cst_15 : f32 to vector<8x128xf32>
      %20 = arith.addf %19, %18 : vector<8x128xf32>
      %21 = tpu.reciprocal %20 : vector<8x128xf32> -> vector<8x128xf32>
      %22 = arith.mulf %15, %21 : vector<8x128xf32>
      %c0_16 = arith.constant 0 : index
      %c0_17 = arith.constant 0 : index
      %23 = vector.load %arg6[%c0_16, %c0_17] : memref<8x128xf32, #tpu.memory_space<vmem>>, vector<8x128xf32>
      tpu.vector_store %arg6[%c0_16, %c0_17], %22 {strides = array<i32>} : memref<8x128xf32, #tpu.memory_space<vmem>>, vector<8x128xf32>,
    } else {
    }
    return
  }
  func.func @transform_0(%arg0: i32, %arg1: i32, %arg2: i32) -> (i32, i32) {
    %c0_i32 = arith.constant 0 : i32
    return %arg0, %arg2 : i32, i32
  }
  func.func @transform_1(%arg0: i32, %arg1: i32, %arg2: i32) -> (i32, i32) {
    %c0_i32 = arith.constant 0 : i32
    return %arg2, %arg1 : i32, i32
  }
  func.func @transform_2(%arg0: i32, %arg1: i32, %arg2: i32) -> (i32, i32) {
    %c0_i32 = arith.constant 0 : i32
    %c0_i32_0 = arith.constant 0 : i32
    return %c0_i32, %arg1 : i32, i32
  }
  func.func @transform_3(%arg0: i32, %arg1: i32, %arg2: i32) -> (i32, i32) {
    %c0_i32 = arith.constant 0 : i32
    return %arg0, %arg1 : i32, i32
  }
}

</mosaic_0001>

<llo_original>
// kernel: random_sparse_nn_forward_prepped.1
$region0: #{random_sparse_nn_forward_prepped.1}
  #allocation0 [shape = 'u32[]', space=smem, size = 0x4, offset = 0x4, fixed_abs, tag = 'smem constant byte address 0x4 - core index']
  #allocation1 [shape = 'u32[144,128]{1,0:T(1,128)}', space=vmem, size = 0x12000, scoped, tag = 'internal scratch']
  %s0 = inlined_call_operand.vmem [shape: f32[8,128], index: 0, kind: input, shape index: {}]
  %s1 = inlined_call_operand.hbm [shape: f32[128,128], index: 1, kind: input, shape index: {}]
  %s2 = inlined_call_operand.vmem [shape: f32[1,128], index: 2, kind: input, shape index: {}]
  %s3 = inlined_call_operand.hbm [shape: f32[8,128], index: 3, kind: output, shape index: {}]
  %s4 = sld [smem:[#allocation0]]
  $region34: #{random_sparse_nn_forward_prepped.1} parent=0
    _
  %s6 = ssub.s32 1, %s4
  %s7 = scalar_select 0, %s6, %s4
  $region1: #{random_sparse_nn_forward_prepped.1} parent=0
    #allocation2 [shape = 'u8[65536]{0}', space=vmem, size = 0x10000, scoped, tag = 'input window, operand 1, single buffered']
    #allocation3 [shape = 's32[1]{0}', space=sflag, size = 0x4, scoped, tag = 'scoped memory for random_sparse_nn_forward_prepped.1']
    #allocation4 [shape = 's32[1]{0}', space=sflag, size = 0x4, scoped, tag = 'scoped memory for random_sparse_nn_forward_prepped.1']
    #allocation5 [shape = 'u8[4096]{0}', space=vmem, size = 0x1000, scoped, tag = 'output window, operand 0, single buffered']
    %8 = vsyncpa [#allocation3], 0
    %9 = vsyncpa [#allocation4], 0
    // Predicated region
    $region2: #{random_sparse_nn_forward_prepped.1} parent=1 // pred_check
      _
    $region3: #{random_sparse_nn_forward_prepped.1} parent=1 // pred_check_branch
      %11 = sbr.rel (0) target = $region5
    $region4: #{random_sparse_nn_forward_prepped.1} parent=1 // pred_region
      _
    $region5: #{random_sparse_nn_forward_prepped.1} parent=1 // pred_fallthru
      _
    // Predicated region
    $region6: #{random_sparse_nn_forward_prepped.1} parent=1 // pred_check
      _
    $region7: #{random_sparse_nn_forward_prepped.1} parent=1 // pred_check_branch
      %13 = sbr.rel (0) target = $region9
    $region8: #{random_sparse_nn_forward_prepped.1} parent=1 // pred_region
      %s15 = ssub.s32 2048, 2048
      %16 = vsyncadd [#allocation3], %s15
      %s17 = sshll.u32 [#allocation2], 4
      %s18 = int_to_ptr.vmem [resolvable:$true] %s17
      %23 = dma.hbm_to_vmem [thread:$0]  %s1, 2048, %s18, [#allocation3], 128, 128, 8
    $region9: #{random_sparse_nn_forward_prepped.1} parent=1 // pred_fallthru
      _
    // Predicated region
    $region10: #{random_sparse_nn_forward_prepped.1} parent=1 // pred_check
      _
    $region11: #{random_sparse_nn_forward_prepped.1} parent=1 // pred_check_branch
      %25 = sbr.rel (0) target = $region13
    $region12: #{random_sparse_nn_forward_prepped.1} parent=1 // pred_region
      _
    $region13: #{random_sparse_nn_forward_prepped.1} parent=1 // pred_fallthru
      _
    // Predicated region
    $region14: #{random_sparse_nn_forward_prepped.1} parent=1 // pred_check
      _
    $region15: #{random_sparse_nn_forward_prepped.1} parent=1 // pred_check_branch
      %27 = sbr.rel (0) target = $region17
    $region16: #{random_sparse_nn_forward_prepped.1} parent=1 // pred_region
      %28 = dma.done [#allocation3], 2048
    $region17: #{random_sparse_nn_forward_prepped.1} parent=1 // pred_fallthru
      _
    %p29 = scmp.eq.s32.totalorder 0, 0
    // Predicated region
    $region18: #{random_sparse_nn_forward_prepped.1} parent=1 // pred_check
      %p30 = pneg %p29
    $region19: #{random_sparse_nn_forward_prepped.1} parent=1 // pred_check_branch
      %32 = sbr.rel (%p30) target = $region21
    $region20: #{random_sparse_nn_forward_prepped.1} parent=1 // pred_region
      %33 = vst [vmem:[#allocation5] sm:$0xff] 0.0
    $region21: #{random_sparse_nn_forward_prepped.1} parent=1 // pred_fallthru
      _
    %v34 = vld [vmem:[#allocation5] sm:$0xff]
    %v35 = vld [vmem:[%s0] sm:$0xff]
    %v36 = vld [vmem:[#allocation2] sm:$0xff]
    %v37 = vld [vmem:[#allocation2 + $0x8] sm:$0xff]
    %v38 = vld [vmem:[#allocation2 + $0x10] sm:$0xff]
    %v39 = vld [vmem:[#allocation2 + $0x18] sm:$0xff]
    %v40 = vld [vmem:[#allocation2 + $0x20] sm:$0xff]
    %v41 = vld [vmem:[#allocation2 + $0x28] sm:$0xff]
    %v42 = vld [vmem:[#allocation2 + $0x30] sm:$0xff]
    %v43 = vld [vmem:[#allocation2 + $0x38] sm:$0xff]
    %v44 = vld [vmem:[#allocation2 + $0x40] sm:$0xff]
    %v45 = vld [vmem:[#allocation2 + $0x48] sm:$0xff]
    %v46 = vld [vmem:[#allocation2 + $0x50] sm:$0xff]
    %v47 = vld [vmem:[#allocation2 + $0x58] sm:$0xff]
    %v48 = vld [vmem:[#allocation2 + $0x60] sm:$0xff]
    %v49 = vld [vmem:[#allocation2 + $0x68] sm:$0xff]
    %v50 = vld [vmem:[#allocation2 + $0x70] sm:$0xff]
    %v51 = vld [vmem:[#allocation2 + $0x78] sm:$0xff]
    %52 = vmatprep.subr.mxu0 0.0
    %53 = vmatpush1.msra.mxu0 %v36
    %54 = vmatprep.subr.mxu0 0.0
    %55 = vmatpush1.msra.mxu0 %v37
    %56 = vmatprep.subr.mxu0 0.0
    %57 = vmatpush1.msra.mxu0 %v38
    %58 = vmatprep.subr.mxu0 0.0
    %59 = vmatpush1.msra.mxu0 %v39
    %60 = vmatprep.subr.mxu0 0.0
    %61 = vmatpush1.msra.mxu0 %v40
    %62 = vmatprep.subr.mxu0 0.0
    %63 = vmatpush1.msra.mxu0 %v41
    %64 = vmatprep.subr.mxu0 0.0
    %65 = vmatpush1.msra.mxu0 %v42
    %66 = vmatprep.subr.mxu0 0.0
    %67 = vmatpush1.msra.mxu0 %v43
    %68 = vmatprep.subr.mxu0 0.0
    %69 = vmatpush1.msra.mxu0 %v44
    %70 = vmatprep.subr.mxu0 0.0
    %71 = vmatpush1.msra.mxu0 %v45
    %72 = vmatprep.subr.mxu0 0.0
    %73 = vmatpush1.msra.mxu0 %v46
    %74 = vmatprep.subr.mxu0 0.0
    %75 = vmatpush1.msra.mxu0 %v47
    %76 = vmatprep.subr.mxu0 0.0
    %77 = vmatpush1.msra.mxu0 %v48
    %78 = vmatprep.subr.mxu0 0.0
    %79 = vmatpush1.msra.mxu0 %v49
    %80 = vmatprep.subr.mxu0 0.0
    %81 = vmatpush1.msra.mxu0 %v50
    %82 = vmatprep.subr.mxu0 0.0
    %83 = vmatpush1.msra.mxu0 %v51
    %84 = vmatprep.subr.mxu0 0.0
    %85 = vmatpush1.msra.mxu0 0.0
    %86 = vmatprep.subr.mxu0 0.0
    %87 = vmatpush1.msra.mxu0 0.0
    %88 = vmatprep.subr.mxu0 0.0
    %89 = vmatpush1.msra.mxu0 0.0
    %90 = vmatprep.subr.mxu0 0.0
    %91 = vmatpush1.msra.mxu0 0.0
    %92 = vmatprep.subr.mxu0 0.0
    %93 = vmatpush1.msra.mxu0 0.0
    %94 = vmatprep.subr.mxu0 0.0
    %95 = vmatpush1.msra.mxu0 0.0
    %96 = vmatprep.subr.mxu0 0.0
    %97 = vmatpush1.msra.mxu0 0.0
    %98 = vmatprep.subr.mxu0 0.0
    %99 = vmatpush1.msra.mxu0 0.0
    %100 = vmatprep.subr.mxu0 0.0
    %101 = vmatpush1.msra.mxu0 0.0
    %102 = vmatprep.subr.mxu0 0.0
    %103 = vmatpush1.msra.mxu0 0.0
    %104 = vmatprep.subr.mxu0 0.0
    %105 = vmatpush1.msra.mxu0 0.0
    %106 = vmatprep.subr.mxu0 0.0
    %107 = vmatpush1.msra.mxu0 0.0
    %108 = vmatprep.subr.mxu0 0.0
    %109 = vmatpush1.msra.mxu0 0.0
    %110 = vmatprep.subr.mxu0 0.0
    %111 = vmatpush1.msra.mxu0 0.0
    %112 = vmatprep.subr.mxu0 0.0
    %113 = vmatpush1.msra.mxu0 0.0
    %114 = vmatprep.subr.mxu0 0.0
    %115 = vmatpush1.msra.mxu0 0.0
    %116 = vmatprep.mubr.f32.mxu0 0.0
    %117 = vmatmul.mubr.f32.gmra.mrb[0].mxu0 %v35
    %v118 = vpop.f32.mrb[0].mxu0
    %v119 = vadd.f32 0.0, %v118
    %v120 = vpop.f32.mrb[0].mxu0
    %121 = vdwg.mxu0
    %v122 = vadd.f32 %v34, %v119
    %123 = vst [vmem:[#allocation5] sm:$0xff] %v122
    // Predicated region
    $region22: #{random_sparse_nn_forward_prepped.1} parent=1 // pred_check
      %p124 = pneg %p29
    $region23: #{random_sparse_nn_forward_prepped.1} parent=1 // pred_check_branch
      %126 = sbr.rel (%p124) target = $region25
    $region24: #{random_sparse_nn_forward_prepped.1} parent=1 // pred_region
      %v127 = vld [vmem:[#allocation5] sm:$0xff]
      %v128 = vld [vmem:[%s2] sm:$0x1]
      %v130 = vlaneseq
      %v131 = vshrl.u32 %v130, 7
      %v132 = vsub.s32 0, %v131
      %v133 = vrot.slane %v128, %v132
      %v135 = vadd.f32 %v127, %v133
      %v136 = vmul.f32 %v135, -1.702
      %v137 = vmul.f32 %v136, 1.442695
      %v138 = vpow.pop %v137
      %v139 = vadd.f32 %v138, 1.0
      %v140 = vrcp.pop %v139
      %v141 = vmul.f32 %v135, %v140
      %142 = vst [vmem:[#allocation5] sm:$0xff] %v141
    $region25: #{random_sparse_nn_forward_prepped.1} parent=1 // pred_fallthru
      _
    // Predicated region
    $region26: #{random_sparse_nn_forward_prepped.1} parent=1 // pred_check
      _
    $region27: #{random_sparse_nn_forward_prepped.1} parent=1 // pred_check_branch
      %144 = sbr.rel (0) target = $region29
    $region28: #{random_sparse_nn_forward_prepped.1} parent=1 // pred_region
      %s146 = ssub.s32 128, 128
      %147 = vsyncadd [#allocation4], %s146
      %s149 = sshll.u32 [#allocation5], 4
      %s150 = int_to_ptr.vmem [resolvable:$true] %s149
      %152 = dma.vmem_to_hbm [thread:$0]  %s150, 128, %s3, [#allocation4]
    $region29: #{random_sparse_nn_forward_prepped.1} parent=1 // pred_fallthru
      _
    // Predicated region
    $region30: #{random_sparse_nn_forward_prepped.1} parent=1 // pred_check
      _
    $region31: #{random_sparse_nn_forward_prepped.1} parent=1 // pred_check_branch
      %154 = sbr.rel (0) target = $region33
    $region32: #{random_sparse_nn_forward_prepped.1} parent=1 // pred_region
      %155 = dma.done [#allocation4], 128
    $region33: #{random_sparse_nn_forward_prepped.1} parent=1 // pred_fallthru
      _
    %156 = vsyncpa [#allocation3], 1
    %157 = vsyncpa [#allocation4], 1

</llo_original>
